<compile_context>
chip_gen: v7x
topology: tpu7x:2x2x1
jax: 0.10.0
libtpu: 0.0.40
codegen_flags: <defaults>
</compile_context>

<pallas_src>
import functools
import math

import jax
import jax.numpy as jnp
from jax.experimental import pallas as pl
from jax.experimental.pallas import tpu as pltpu


# ----------------------------- fused Pallas kernel ----------------------------- #

def fused_conv_pool_heads_kernel(x_ref, w_ref, bconv_ref, wheadT_ref, bhead_ref,
                                 feat_ref, logits_ref, *, imgs, hw, inv_hw):
    """One grid step processes `imgs` images (batch folded into the GEMM N dim).

    x_ref:      [KP, imgs*hw]     im2col activations (K = 9*Cin, zero-padded to KP)
    w_ref:      [Cout, KP]        weight-stationary conv weight
    bconv_ref:  [Cout, 1]         conv bias (broadcast across lanes)
    wheadT_ref: [DH, Cout]        selected head weight, transposed & row-padded
    bhead_ref:  [DH, 1]           selected head bias (column)
    feat_ref:   [imgs, Cout, hw]  hooked conv+ReLU features (output, NCHW-flat)
    logits_ref: [1, DH, imgs]     head logits, transposed (one column per image)
    """
    # Single weight-stationary GEMM over all images in the step:
    #   feat[Cout, imgs*hw] = W[Cout, KP] @ X[KP, imgs*hw]      (K folded, N folded)
    acc = jnp.dot(w_ref[...], x_ref[...], preferred_element_type=jnp.float32)

    # bias + ReLU on full-width (H*W-on-lanes) vregs.
    feat = jnp.maximum(acc + bconv_ref[...], 0.0)              # [Cout, imgs*hw]

    # Per-image, 128-aligned lane slices: lane-dense feature store + XLU lane-reduce pool.
    pooled_cols = []
    for i in range(imgs):                                      # static unroll (tiny)
        fi = feat[:, i * hw:(i + 1) * hw]                      # [Cout, hw]
        feat_ref[i] = fi.astype(feat_ref.dtype)                # unmasked lane-dense vst
        pooled_cols.append(jnp.sum(fi, axis=-1, keepdims=True) * inv_hw)   # [Cout, 1]
    pooled = jnp.concatenate(pooled_cols, axis=-1)             # [Cout, imgs]

    # Head in transposed form (avoids transposing `pooled`):
    #   logits_T[DH, imgs] = Whead^T[DH, Cout] @ pooled[Cout, imgs] + b[DH, 1]
    logits_ref[0] = (jnp.dot(wheadT_ref[...], pooled,
                             preferred_element_type=jnp.float32) + bhead_ref[...])


# -------------------------------- forward pass --------------------------------- #

def hook_model_forward(x_nchw, params, challenge="Exp", imgs_per_step=None):
    """Replicates hook_model.forward(x) -> (features, output)."""
    B, Cin, H, W = x_nchw.shape
    Cout = params["conv_w"].shape[0]
    HW = H * W

    # Default: fold the whole batch into one grid step (one launch, one GEMM).
    # For v7x's two TensorCores, pass imgs_per_step = cdiv(B, 2) to get 2 parallel blocks.
    imgs = B if imgs_per_step is None else imgs_per_step
    assert B % imgs == 0, "batch must divide evenly into imgs_per_step"
    num_steps = B // imgs

    # ---- wrapper-side layout prep (tiny layout plumbing, tens of KB) ----
    # im2col: Xcol[k, b*HW + h*W + w] = x_pad[b, cin, h+kh, w+kw], k = (kh*3+kw)*Cin + cin
    x_pad = jnp.pad(x_nchw, ((0, 0), (0, 0), (1, 1), (1, 1)))       # [B, Cin, H+2, W+2]
    taps = [x_pad[:, :, kh:kh + H, kw:kw + W]
            for kh in range(3) for kw in range(3)]                  # 9 x [B, Cin, H, W]
    A = jnp.transpose(jnp.stack(taps, axis=0), (0, 2, 1, 3, 4))     # [9, Cin, B, H, W]
    K = 9 * Cin
    KP = ((K + 7) // 8) * 8                                         # pad K to sublane mult
    x_col = A.reshape(K, B * HW)
    x_col = jnp.pad(x_col, ((0, KP - K), (0, 0)))                   # [KP, B*HW]

    # conv weight OIHW [Cout, Cin, 3, 3] -> weight-stationary [Cout, KP]
    w_mat = jnp.transpose(params["conv_w"], (0, 2, 3, 1)).reshape(Cout, K)
    w_mat = jnp.pad(w_mat, ((0, 0), (0, KP - K)))
    b_conv = params["conv_b"].reshape(Cout, 1)

    # Skip the head that `challenge` never uses (static Python branch); pack the
    # needed head(s), transposed, into [DH, Cout] with DH rounded up to a sublane mult.
    if challenge == "Exp":
        head_ws, head_bs = [params["wexp"]], [params["bexp"]]
    elif challenge == "VA":
        head_ws, head_bs = [params["wva"]], [params["bva"]]
    else:
        head_ws, head_bs = [params["wexp"], params["wva"]], [params["bexp"], params["bva"]]
    w_cat = jnp.concatenate(head_ws, axis=1)                        # [Cout, D]
    b_cat = jnp.concatenate(head_bs, axis=0)                        # [D]
    D = w_cat.shape[1]
    DH = max(8, ((D + 7) // 8) * 8)
    w_head_t = jnp.zeros((DH, Cout), jnp.float32).at[:D].set(w_cat.T)
    b_head = jnp.zeros((DH, 1), jnp.float32).at[:D, 0].set(b_cat)

    kernel = functools.partial(fused_conv_pool_heads_kernel,
                               imgs=imgs, hw=HW, inv_hw=1.0 / float(HW))

    feat, logits_t = pl.pallas_call(
        kernel,
        out_shape=(jax.ShapeDtypeStruct((B, Cout, HW), jnp.float32),
                   jax.ShapeDtypeStruct((num_steps, DH, imgs), jnp.float32)),
        grid=(num_steps,),
        in_specs=[
            pl.BlockSpec((KP, imgs * HW), lambda s: (0, s)),   # batch folded into lanes
            pl.BlockSpec((Cout, KP), lambda s: (0, 0)),        # resident
            pl.BlockSpec((Cout, 1), lambda s: (0, 0)),         # resident
            pl.BlockSpec((DH, Cout), lambda s: (0, 0)),        # resident
            pl.BlockSpec((DH, 1), lambda s: (0, 0)),           # resident
        ],
        out_specs=(
            pl.BlockSpec((imgs, Cout, HW), lambda s: (s, 0, 0)),   # NCHW already
            pl.BlockSpec((1, DH, imgs), lambda s: (s, 0, 0)),
        ),
        compiler_params=pltpu.CompilerParams(
            # Batch-chunk axis is independent -> megacore/dual-TC shards it if >1 step.
            dimension_semantics=("parallel",),
            # Per-step buffers are KB-scale; 32 MiB is safe on v5e/v6e/v7x.
            vmem_limit_bytes=32 * 1024 * 1024,
        ),
    )(x_col, w_mat, b_conv, w_head_t, b_head)

    # [num_steps, DH, imgs] -> [B, DH] -> slice the real head width.
    logits = jnp.transpose(logits_t, (0, 2, 1)).reshape(B, DH)[:, :D]

    # hook_model output-selection logic (challenge is static -> trace-time branch).
    # TODO(synk): .detach() and forward-hook registration have no runtime meaning in JAX;
    #             the hooked-layer output is simply returned as the first element.
    if challenge == "Exp" or challenge == "VA":
        output = logits
    else:
        d0 = head_ws[0].shape[1]
        output = (logits[:, :d0], logits[:, d0:])

    # Hooked conv+ReLU features come out of the kernel already NCHW-ordered.
    features_nchw = feat.reshape(B, Cout, H, W)
    return features_nchw, output


# ------------------------------ deterministic init ------------------------------ #

def init_params(key, cin=4, cout=32, dexp=8, dva=2):
    k1, k2, k3, k4, k5, k6 = jax.random.split(key, 6)
    conv_scale = 1.0 / math.sqrt(9 * cin)
    head_scale = 1.0 / math.sqrt(cout)
    return {
        "conv_w": conv_scale * jax.random.normal(k1, (cout, cin, 3, 3), jnp.float32),
        "conv_b": conv_scale * jax.random.normal(k2, (cout,), jnp.float32),
        "wexp": head_scale * jax.random.normal(k3, (cout, dexp), jnp.float32),
        "bexp": head_scale * jax.random.normal(k4, (dexp,), jnp.float32),
        "wva": head_scale * jax.random.normal(k5, (cout, dva), jnp.float32),
        "bva": head_scale * jax.random.normal(k6, (dva,), jnp.float32),
    }


# ------------------------------------ main -------------------------------------- #

if __name__ == "__main__":
    key = jax.random.PRNGKey(0)
    kx, kp = jax.random.split(key)

    B, Cin, H, W = 2, 4, 16, 16
    Cout, Dexp, Dva = 32, 8, 2
    x = jax.random.normal(kx, (B, Cin, H, W), jnp.float32)   # NCHW input
    params = init_params(kp, cin=Cin, cout=Cout, dexp=Dexp, dva=Dva)

    fwd = jax.jit(functools.partial(hook_model_forward, challenge="Exp"))
    features, output = fwd(x, params)
    jax.block_until_ready((features, output))

    # Pure-JAX reference for correctness.
    ref_conv = jax.lax.conv_general_dilated(
        x, params["conv_w"], window_strides=(1, 1), padding="SAME",
        dimension_numbers=("NCHW", "OIHW", "NCHW"),
    ) + params["conv_b"].reshape(1, -1, 1, 1)
    ref_feat = jnp.maximum(ref_conv, 0.0)
    pooled = ref_feat.mean(axis=(2, 3))
    ref_exp = pooled @ params["wexp"] + params["bexp"]

    assert features.shape == (B, Cout, H, W), features.shape
    assert output.shape == (B, Dexp), output.shape
    assert jnp.allclose(features, ref_feat, atol=5e-4, rtol=5e-4)
    assert jnp.allclose(output, ref_exp, atol=5e-4, rtol=5e-4)

    print("KERNEL_OK")
</pallas_src>

<mosaic_0001>
module attributes {stable_mosaic.version = 11 : i64} {
  func.func @fused_conv_pool_heads_kernel(%arg0: i32, %arg1: memref<40x512xf32, #tpu.memory_space<vmem>>, %arg2: memref<32x40xf32, #tpu.memory_space<vmem>>, %arg3: memref<32x1xf32, #tpu.memory_space<vmem>>, %arg4: memref<8x32xf32, #tpu.memory_space<vmem>>, %arg5: memref<8x1xf32, #tpu.memory_space<vmem>>, %arg6: memref<2x32x256xf32, #tpu.memory_space<vmem>>, %arg7: memref<1x8x2xf32, #tpu.memory_space<vmem>>) attributes {dimension_semantics = [#tpu.dimension_semantics<parallel>], iteration_bounds = array<i64: 1>, scalar_prefetch = 0 : i64, scratch_operands = 0 : i64, tpu.core_type = #tpu.core_type<tc>, window_params = [{transform_indices = @transform_0, window_bounds = array<i64: 40, 512>}, {pipeline_mode = #tpu.pipeline_mode<synchronous>, transform_indices = @transform_1, window_bounds = array<i64: 32, 40>}, {pipeline_mode = #tpu.pipeline_mode<synchronous>, transform_indices = @transform_2, window_bounds = array<i64: 32, 1>}, {pipeline_mode = #tpu.pipeline_mode<synchronous>, transform_indices = @transform_3, window_bounds = array<i64: 8, 32>}, {pipeline_mode = #tpu.pipeline_mode<synchronous>, transform_indices = @transform_4, window_bounds = array<i64: 8, 1>}, {transform_indices = @transform_5, window_bounds = array<i64: 2, 32, 256>}, {transform_indices = @transform_6, window_bounds = array<i64: 1, 8, 2>}]} {
    %c0 = arith.constant 0 : index
    %c0_0 = arith.constant 0 : index
    %0 = vector.load %arg2[%c0, %c0_0] : memref<32x40xf32, #tpu.memory_space<vmem>>, vector<32x40xf32>
    %c0_1 = arith.constant 0 : index
    %c0_2 = arith.constant 0 : index
    %1 = vector.load %arg1[%c0_1, %c0_2] : memref<40x512xf32, #tpu.memory_space<vmem>>, vector<40x512xf32>
    %cst = arith.constant dense<0.000000e+00> : vector<32x512xf32>
    %2 = tpu.matmul %0, %1, %cst {dimension_numbers = #tpu.dot_dimension_numbers<[1], [0], [0], [1], [0, 0, 1, 1], [], []>} : vector<32x40xf32>, vector<40x512xf32>, vector<32x512xf32> -> vector<32x512xf32>
    %c0_3 = arith.constant 0 : index
    %c0_4 = arith.constant 0 : index
    %3 = vector.load %arg3[%c0_3, %c0_4] : memref<32x1xf32, #tpu.memory_space<vmem>>, vector<32x1xf32>
    %4 = vector.broadcast %3 : vector<32x1xf32> to vector<32x512xf32>
    %5 = arith.addf %2, %4 : vector<32x512xf32>
    %cst_5 = arith.constant 0.000000e+00 : f32
    %6 = vector.broadcast %cst_5 : f32 to vector<32x512xf32>
    %7 = arith.maximumf %5, %6 : vector<32x512xf32>
    %8 = vector.extract_strided_slice %7 {offsets = [0, 0], sizes = [32, 256], strides = [1, 1]} : vector<32x512xf32> to vector<32x256xf32>
    %c0_6 = arith.constant 0 : index
    %c0_7 = arith.constant 0 : index
    %c0_8 = arith.constant 0 : index
    %9 = vector.load %arg6[%c0_6, %c0_7, %c0_8] : memref<2x32x256xf32, #tpu.memory_space<vmem>>, vector<1x32x256xf32>
    %10 = vector.shape_cast %9 : vector<1x32x256xf32> to vector<32x256xf32>
    %11 = vector.shape_cast %8 : vector<32x256xf32> to vector<1x32x256xf32>
    tpu.vector_store %arg6[%c0_6, %c0_7, %c0_8], %11 {strides = array<i32>} : memref<2x32x256xf32, #tpu.memory_space<vmem>>, vector<1x32x256xf32>,
    %cst_9 = arith.constant dense<0.000000e+00> : vector<32xf32>
    %12 = vector.multi_reduction <add>, %8, %cst_9 [1] : vector<32x256xf32> to vector<32xf32>
    %13 = vector.shape_cast %12 : vector<32xf32> to vector<32x1xf32>
    %cst_10 = arith.constant 3.906250e-03 : f32
    %14 = vector.broadcast %cst_10 : f32 to vector<32x1xf32>
    %15 = arith.mulf %13, %14 : vector<32x1xf32>
    %16 = vector.extract_strided_slice %7 {offsets = [0, 256], sizes = [32, 256], strides = [1, 1]} : vector<32x512xf32> to vector<32x256xf32>
    %c1 = arith.constant 1 : index
    %c0_11 = arith.constant 0 : index
    %c0_12 = arith.constant 0 : index
    %17 = vector.load %arg6[%c1, %c0_11, %c0_12] : memref<2x32x256xf32, #tpu.memory_space<vmem>>, vector<1x32x256xf32>
    %18 = vector.shape_cast %17 : vector<1x32x256xf32> to vector<32x256xf32>
    %19 = vector.shape_cast %16 : vector<32x256xf32> to vector<1x32x256xf32>
    tpu.vector_store %arg6[%c1, %c0_11, %c0_12], %19 {strides = array<i32>} : memref<2x32x256xf32, #tpu.memory_space<vmem>>, vector<1x32x256xf32>,
    %cst_13 = arith.constant dense<0.000000e+00> : vector<32xf32>
    %20 = vector.multi_reduction <add>, %16, %cst_13 [1] : vector<32x256xf32> to vector<32xf32>
    %21 = vector.shape_cast %20 : vector<32xf32> to vector<32x1xf32>
    %cst_14 = arith.constant 3.906250e-03 : f32
    %22 = vector.broadcast %cst_14 : f32 to vector<32x1xf32>
    %23 = arith.mulf %21, %22 : vector<32x1xf32>
    %24 = tpu.concatenate %15, %23 in 1 : vector<32x1xf32>, vector<32x1xf32> -> vector<32x2xf32>
    %c0_15 = arith.constant 0 : index
    %c0_16 = arith.constant 0 : index
    %25 = vector.load %arg4[%c0_15, %c0_16] : memref<8x32xf32, #tpu.memory_space<vmem>>, vector<8x32xf32>
    %cst_17 = arith.constant dense<0.000000e+00> : vector<8x2xf32>
    %26 = tpu.matmul %25, %24, %cst_17 {dimension_numbers = #tpu.dot_dimension_numbers<[1], [0], [0], [1], [0, 0, 1, 1], [], []>} : vector<8x32xf32>, vector<32x2xf32>, vector<8x2xf32> -> vector<8x2xf32>
    %c0_18 = arith.constant 0 : index
    %c0_19 = arith.constant 0 : index
    %27 = vector.load %arg5[%c0_18, %c0_19] : memref<8x1xf32, #tpu.memory_space<vmem>>, vector<8x1xf32>
    %28 = vector.broadcast %27 : vector<8x1xf32> to vector<8x2xf32>
    %29 = arith.addf %26, %28 : vector<8x2xf32>
    %c0_20 = arith.constant 0 : index
    %c0_21 = arith.constant 0 : index
    %c0_22 = arith.constant 0 : index
    %30 = vector.load %arg7[%c0_20, %c0_21, %c0_22] : memref<1x8x2xf32, #tpu.memory_space<vmem>>, vector<1x8x2xf32>
    %31 = vector.shape_cast %30 : vector<1x8x2xf32> to vector<8x2xf32>
    %32 = vector.shape_cast %29 : vector<8x2xf32> to vector<1x8x2xf32>
    tpu.vector_store %arg7[%c0_20, %c0_21, %c0_22], %32 {strides = array<i32>} : memref<1x8x2xf32, #tpu.memory_space<vmem>>, vector<1x8x2xf32>,
    return
  }
  func.func @transform_0(%arg0: i32) -> (i32, i32) {
    %c0_i32 = arith.constant 0 : i32
    %c0_i32_0 = arith.constant 0 : i32
    return %c0_i32, %arg0 : i32, i32
  }
  func.func @transform_1(%arg0: i32) -> (i32, i32) {
    %c0_i32 = arith.constant 0 : i32
    %c0_i32_0 = arith.constant 0 : i32
    %c0_i32_1 = arith.constant 0 : i32
    return %c0_i32, %c0_i32_0 : i32, i32
  }
  func.func @transform_2(%arg0: i32) -> (i32, i32) {
    %c0_i32 = arith.constant 0 : i32
    %c0_i32_0 = arith.constant 0 : i32
    %c0_i32_1 = arith.constant 0 : i32
    return %c0_i32, %c0_i32_0 : i32, i32
  }
  func.func @transform_3(%arg0: i32) -> (i32, i32) {
    %c0_i32 = arith.constant 0 : i32
    %c0_i32_0 = arith.constant 0 : i32
    %c0_i32_1 = arith.constant 0 : i32
    return %c0_i32, %c0_i32_0 : i32, i32
  }
  func.func @transform_4(%arg0: i32) -> (i32, i32) {
    %c0_i32 = arith.constant 0 : i32
    %c0_i32_0 = arith.constant 0 : i32
    %c0_i32_1 = arith.constant 0 : i32
    return %c0_i32, %c0_i32_0 : i32, i32
  }
  func.func @transform_5(%arg0: i32) -> (i32, i32, i32) {
    %c0_i32 = arith.constant 0 : i32
    %c0_i32_0 = arith.constant 0 : i32
    %c0_i32_1 = arith.constant 0 : i32
    return %arg0, %c0_i32, %c0_i32_0 : i32, i32, i32
  }
  func.func @transform_6(%arg0: i32) -> (i32, i32, i32) {
    %c0_i32 = arith.constant 0 : i32
    %c0_i32_0 = arith.constant 0 : i32
    %c0_i32_1 = arith.constant 0 : i32
    return %arg0, %c0_i32, %c0_i32_0 : i32, i32, i32
  }
}

</mosaic_0001>

<llo_original>
// kernel: hook_model_forward.1
$region0: #{hook_model_forward.1}
  #allocation0 [shape = 'u32[]', space=smem, size = 0x4, offset = 0x4, fixed_abs, tag = 'smem constant byte address 0x4 - core index']
  #allocation1 [shape = 'u32[144,128]{1,0:T(1,128)}', space=vmem, size = 0x12000, scoped, tag = 'internal scratch']
  %s0 = inlined_call_operand.vmem [shape: f32[40,512], index: 0, kind: input, shape index: {}]
  %s1 = inlined_call_operand.vmem [shape: f32[32,40], index: 1, kind: input, shape index: {}]
  %s2 = inlined_call_operand.vmem [shape: f32[32,1], index: 2, kind: input, shape index: {}]
  %s3 = inlined_call_operand.vmem [shape: f32[8,32], index: 3, kind: input, shape index: {}]
  %s4 = inlined_call_operand.vmem [shape: f32[8,1], index: 4, kind: input, shape index: {}]
  %s5 = inlined_call_operand.vmem [shape: f32[2,32,256], index: 5, kind: output, shape index: {0}]
  %s6 = inlined_call_operand.vmem [shape: f32[1,8,2], index: 6, kind: output, shape index: {1}]
  %7 = xla_tuple %s5, %s6
  %s8 = sld [smem:[#allocation0]]
  $region38: #{hook_model_forward.1} parent=0
    _
  %s10 = ssub.s32 1, %s8
  %s11 = scalar_select 0, %s10, %s8
  // Predicated region
  $region2: #{hook_model_forward.1} parent=0 // pred_check
    _
  $region3: #{hook_model_forward.1} parent=0 // pred_check_branch
    %13 = sbr.rel (0) target = $region5
  $region4: #{hook_model_forward.1} parent=0 // pred_region
    _
  $region5: #{hook_model_forward.1} parent=0 // pred_fallthru
    _
  // Predicated region
  $region6: #{hook_model_forward.1} parent=0 // pred_check
    _
  $region7: #{hook_model_forward.1} parent=0 // pred_check_branch
    %15 = sbr.rel (0) target = $region9
  $region8: #{hook_model_forward.1} parent=0 // pred_region
    _
  $region9: #{hook_model_forward.1} parent=0 // pred_fallthru
    _
  // Predicated region
  $region10: #{hook_model_forward.1} parent=0 // pred_check
    _
  $region11: #{hook_model_forward.1} parent=0 // pred_check_branch
    %17 = sbr.rel (0) target = $region13
  $region12: #{hook_model_forward.1} parent=0 // pred_region
    _
  $region13: #{hook_model_forward.1} parent=0 // pred_fallthru
    _
  // Predicated region
  $region14: #{hook_model_forward.1} parent=0 // pred_check
    _
  $region15: #{hook_model_forward.1} parent=0 // pred_check_branch
    %19 = sbr.rel (0) target = $region17
  $region16: #{hook_model_forward.1} parent=0 // pred_region
    _
  $region17: #{hook_model_forward.1} parent=0 // pred_fallthru
    _
  // Predicated region
  $region18: #{hook_model_forward.1} parent=0 // pred_check
    _
  $region19: #{hook_model_forward.1} parent=0 // pred_check_branch
    %21 = sbr.rel (0) target = $region21
  $region20: #{hook_model_forward.1} parent=0 // pred_region
    _
  $region21: #{hook_model_forward.1} parent=0 // pred_fallthru
    _
  %v22 = vld [vmem:[%s1] sm:$0xff]
  %v23 = vld [vmem:[%s1 + $0x8] sm:$0xff]
  %v24 = vld [vmem:[%s1 + $0x10] sm:$0xff]
  %v25 = vld [vmem:[%s1 + $0x18] sm:$0xff]
  %v26 = vld [vmem:[%s0] sm:$0xff]
  %v27 = vld [vmem:[%s0 + $0x8] sm:$0xff]
  %v28 = vld [vmem:[%s0 + $0x10] sm:$0xff]
  %v29 = vld [vmem:[%s0 + $0x18] sm:$0xff]
  %v30 = vld [vmem:[%s0 + $0x20] sm:$0xff]
  %v31 = vld [vmem:[%s0 + $0x28] sm:$0xff]
  %v32 = vld [vmem:[%s0 + $0x30] sm:$0xff]
  %v33 = vld [vmem:[%s0 + $0x38] sm:$0xff]
  %v34 = vld [vmem:[%s0 + $0x40] sm:$0xff]
  %v35 = vld [vmem:[%s0 + $0x48] sm:$0xff]
  %v36 = vld [vmem:[%s0 + $0x50] sm:$0xff]
  %v37 = vld [vmem:[%s0 + $0x58] sm:$0xff]
  %v38 = vld [vmem:[%s0 + $0x60] sm:$0xff]
  %v39 = vld [vmem:[%s0 + $0x68] sm:$0xff]
  %v40 = vld [vmem:[%s0 + $0x70] sm:$0xff]
  %v41 = vld [vmem:[%s0 + $0x78] sm:$0xff]
  %v42 = vld [vmem:[%s0 + $0x80] sm:$0xff]
  %v43 = vld [vmem:[%s0 + $0x88] sm:$0xff]
  %v44 = vld [vmem:[%s0 + $0x90] sm:$0xff]
  %v45 = vld [vmem:[%s0 + $0x98] sm:$0xff]
  %v46 = vld [vmem:[%s2] sm:$0xff]
  %v47 = vld [vmem:[%s2 + $0x8] sm:$0xff]
  %v48 = vld [vmem:[%s2 + $0x10] sm:$0xff]
  %v49 = vld [vmem:[%s2 + $0x18] sm:$0xff]
  %51 = vset.pattern.permute.xlu0 0
  %52 = vperm.xlu0 %51, %v46
  %v53 = vpop.permute.xlu0 %52
  %56 = vset.pattern.permute.xlu0 0
  %57 = vperm.xlu0 %56, %v47
  %v58 = vpop.permute.xlu0 %57
  %61 = vset.pattern.permute.xlu0 0
  %62 = vperm.xlu0 %61, %v48
  %v63 = vpop.permute.xlu0 %62
  %66 = vset.pattern.permute.xlu0 0
  %67 = vperm.xlu0 %66, %v49
  %v68 = vpop.permute.xlu0 %67
  %vm70 = vcmask 326656
  %v72 = vsel %vm70, %v22, 0
  %v75 = vsel %vm70, %v23, 0
  %v78 = vsel %vm70, %v24, 0
  %v81 = vsel %vm70, %v25, 0
  %83 = vmatprep.subr.mxu0 %v27
  %84 = vmatpush1.msra.mxu0 %v26
  %85 = vmatprep.subr.mxu0 %v31
  %86 = vmatpush1.msra.mxu0 %v30
  %87 = vmatprep.subr.mxu0 %v35
  %88 = vmatpush1.msra.mxu0 %v34
  %89 = vmatprep.subr.mxu0 %v39
  %90 = vmatpush1.msra.mxu0 %v38
  %91 = vmatprep.subr.mxu0 %v43
  %92 = vmatpush1.msra.mxu0 %v42
  %93 = vmatprep.subr.mxu0 0.0
  %94 = vmatpush1.msra.mxu0 0.0
  %95 = vmatprep.subr.mxu0 0.0
  %96 = vmatpush1.msra.mxu0 0.0
  %97 = vmatprep.subr.mxu0 0.0
  %98 = vmatpush1.msra.mxu0 0.0
  %99 = vmatprep.subr.mxu0 0.0
  %100 = vmatpush1.msra.mxu0 0.0
  %101 = vmatprep.subr.mxu0 0.0
  %102 = vmatpush1.msra.mxu0 0.0
  %103 = vmatprep.subr.mxu0 0.0
  %104 = vmatpush1.msra.mxu0 0.0
  %105 = vmatprep.subr.mxu0 0.0
  %106 = vmatpush1.msra.mxu0 0.0
  %107 = vmatprep.subr.mxu0 0.0
  %108 = vmatpush1.msra.mxu0 0.0
  %109 = vmatprep.subr.mxu0 0.0
  %110 = vmatpush1.msra.mxu0 0.0
  %111 = vmatprep.subr.mxu0 0.0
  %112 = vmatpush1.msra.mxu0 0.0
  %113 = vmatprep.subr.mxu0 0.0
  %114 = vmatpush1.msra.mxu0 0.0
  %115 = vmatprep.subr.mxu0 0.0
  %116 = vmatpush1.msra.mxu0 0.0
  %117 = vmatprep.subr.mxu0 0.0
  %118 = vmatpush1.msra.mxu0 0.0
  %119 = vmatprep.subr.mxu0 0.0
  %120 = vmatpush1.msra.mxu0 0.0
  %121 = vmatprep.subr.mxu0 0.0
  %122 = vmatpush1.msra.mxu0 0.0
  %123 = vmatprep.subr.mxu0 0.0
  %124 = vmatpush1.msra.mxu0 0.0
  %125 = vmatprep.subr.mxu0 0.0
  %126 = vmatpush1.msra.mxu0 0.0
  %127 = vmatprep.subr.mxu0 0.0
  %128 = vmatpush1.msra.mxu0 0.0
  %129 = vmatprep.subr.mxu0 0.0
  %130 = vmatpush1.msra.mxu0 0.0
  %131 = vmatprep.subr.mxu0 0.0
  %132 = vmatpush1.msra.mxu0 0.0
  %133 = vmatprep.subr.mxu0 0.0
  %134 = vmatpush1.msra.mxu0 0.0
  %135 = vmatprep.subr.mxu0 0.0
  %136 = vmatpush1.msra.mxu0 0.0
  %137 = vmatprep.subr.mxu0 0.0
  %138 = vmatpush1.msra.mxu0 0.0
  %139 = vmatprep.subr.mxu0 0.0
  %140 = vmatpush1.msra.mxu0 0.0
  %141 = vmatprep.subr.mxu0 0.0
  %142 = vmatpush1.msra.mxu0 0.0
  %143 = vmatprep.subr.mxu0 0.0
  %144 = vmatpush1.msra.mxu0 0.0
  %145 = vmatprep.subr.mxu0 0.0
  %146 = vmatpush1.msra.mxu0 0.0
  %147 = vmatprep.mubr.f32.mxu0 0.0
  %148 = vmatmul.mubr.f32.gmra.mrb[0].mxu0 %v72
  %v149 = vpop.f32.mrb[0].mxu0
  %v150 = vadd.f32 %v53, %v149
  %v151 = vpop.f32.mrb[0].mxu0
  %v152 = vadd.f32 %v53, %v151
  %153 = vmatprep.mubr.f32.mxu0 0.0
  %154 = vmatmul.mubr.f32.gmra.mrb[0].mxu0 %v75
  %v155 = vpop.f32.mrb[0].mxu0
  %v156 = vadd.f32 %v58, %v155
  %v157 = vpop.f32.mrb[0].mxu0
  %v158 = vadd.f32 %v58, %v157
  %159 = vmatprep.mubr.f32.mxu0 0.0
  %160 = vmatmul.mubr.f32.gmra.mrb[0].mxu0 %v78
  %v161 = vpop.f32.mrb[0].mxu0
  %v162 = vadd.f32 %v63, %v161
  %v163 = vpop.f32.mrb[0].mxu0
  %v164 = vadd.f32 %v63, %v163
  %165 = vmatprep.mubr.f32.mxu0 0.0
  %166 = vmatmul.mubr.f32.gmra.mrb[0].mxu0 %v81
  %v167 = vpop.f32.mrb[0].mxu0
  %v168 = vadd.f32 %v68, %v167
  %v169 = vpop.f32.mrb[0].mxu0
  %v170 = vadd.f32 %v68, %v169
  %171 = vdwg.mxu0
  %172 = vmatprep.subr.mxu0 %v29
  %173 = vmatpush1.msra.mxu0 %v28
  %174 = vmatprep.subr.mxu0 %v33
  %175 = vmatpush1.msra.mxu0 %v32
  %176 = vmatprep.subr.mxu0 %v37
  %177 = vmatpush1.msra.mxu0 %v36
  %178 = vmatprep.subr.mxu0 %v41
  %179 = vmatpush1.msra.mxu0 %v40
  %180 = vmatprep.subr.mxu0 %v45
  %181 = vmatpush1.msra.mxu0 %v44
  %182 = vmatprep.subr.mxu0 0.0
  %183 = vmatpush1.msra.mxu0 0.0
  %184 = vmatprep.subr.mxu0 0.0
  %185 = vmatpush1.msra.mxu0 0.0
  %186 = vmatprep.subr.mxu0 0.0
  %187 = vmatpush1.msra.mxu0 0.0
  %188 = vmatprep.subr.mxu0 0.0
  %189 = vmatpush1.msra.mxu0 0.0
  %190 = vmatprep.subr.mxu0 0.0
  %191 = vmatpush1.msra.mxu0 0.0
  %192 = vmatprep.subr.mxu0 0.0
  %193 = vmatpush1.msra.mxu0 0.0
  %194 = vmatprep.subr.mxu0 0.0
  %195 = vmatpush1.msra.mxu0 0.0
  %196 = vmatprep.subr.mxu0 0.0
  %197 = vmatpush1.msra.mxu0 0.0
  %198 = vmatprep.subr.mxu0 0.0
  %199 = vmatpush1.msra.mxu0 0.0
  %200 = vmatprep.subr.mxu0 0.0
  %201 = vmatpush1.msra.mxu0 0.0
  %202 = vmatprep.subr.mxu0 0.0
  %203 = vmatpush1.msra.mxu0 0.0
  %204 = vmatprep.subr.mxu0 0.0
  %205 = vmatpush1.msra.mxu0 0.0
  %206 = vmatprep.subr.mxu0 0.0
  %207 = vmatpush1.msra.mxu0 0.0
  %208 = vmatprep.subr.mxu0 0.0
  %209 = vmatpush1.msra.mxu0 0.0
  %210 = vmatprep.subr.mxu0 0.0
  %211 = vmatpush1.msra.mxu0 0.0
  %212 = vmatprep.subr.mxu0 0.0
  %213 = vmatpush1.msra.mxu0 0.0
  %214 = vmatprep.subr.mxu0 0.0
  %215 = vmatpush1.msra.mxu0 0.0
  %216 = vmatprep.subr.mxu0 0.0
  %217 = vmatpush1.msra.mxu0 0.0
  %218 = vmatprep.subr.mxu0 0.0
  %219 = vmatpush1.msra.mxu0 0.0
  %220 = vmatprep.subr.mxu0 0.0
  %221 = vmatpush1.msra.mxu0 0.0
  %222 = vmatprep.subr.mxu0 0.0
  %223 = vmatpush1.msra.mxu0 0.0
  %224 = vmatprep.subr.mxu0 0.0
  %225 = vmatpush1.msra.mxu0 0.0
  %226 = vmatprep.subr.mxu0 0.0
  %227 = vmatpush1.msra.mxu0 0.0
  %228 = vmatprep.subr.mxu0 0.0
  %229 = vmatpush1.msra.mxu0 0.0
  %230 = vmatprep.subr.mxu0 0.0
  %231 = vmatpush1.msra.mxu0 0.0
  %232 = vmatprep.subr.mxu0 0.0
  %233 = vmatpush1.msra.mxu0 0.0
  %234 = vmatprep.subr.mxu0 0.0
  %235 = vmatpush1.msra.mxu0 0.0
  %236 = vmatprep.mubr.f32.mxu0 0.0
  %237 = vmatmul.mubr.f32.gmra.mrb[0].mxu0 %v72
  %v238 = vpop.f32.mrb[0].mxu0
  %v239 = vadd.f32 %v53, %v238
  %v240 = vpop.f32.mrb[0].mxu0
  %v241 = vadd.f32 %v53, %v240
  %242 = vmatprep.mubr.f32.mxu0 0.0
  %243 = vmatmul.mubr.f32.gmra.mrb[0].mxu0 %v75
  %v244 = vpop.f32.mrb[0].mxu0
  %v245 = vadd.f32 %v58, %v244
  %v246 = vpop.f32.mrb[0].mxu0
  %v247 = vadd.f32 %v58, %v246
  %248 = vmatprep.mubr.f32.mxu0 0.0
  %249 = vmatmul.mubr.f32.gmra.mrb[0].mxu0 %v78
  %v250 = vpop.f32.mrb[0].mxu0
  %v251 = vadd.f32 %v63, %v250
  %v252 = vpop.f32.mrb[0].mxu0
  %v253 = vadd.f32 %v63, %v252
  %254 = vmatprep.mubr.f32.mxu0 0.0
  %255 = vmatmul.mubr.f32.gmra.mrb[0].mxu0 %v81
  %v256 = vpop.f32.mrb[0].mxu0
  %v257 = vadd.f32 %v68, %v256
  %v258 = vpop.f32.mrb[0].mxu0
  %v259 = vadd.f32 %v68, %v258
  %260 = vdwg.mxu0
  %v261 = vmax.f32 %v150, 0.0
  %v262 = vmax.f32 %v152, 0.0
  %v263 = vmax.f32 %v239, 0.0
  %v264 = vmax.f32 %v241, 0.0
  %v265 = vmax.f32 %v156, 0.0
  %v266 = vmax.f32 %v158, 0.0
  %v267 = vmax.f32 %v245, 0.0
  %v268 = vmax.f32 %v247, 0.0
  %v269 = vmax.f32 %v162, 0.0
  %v270 = vmax.f32 %v164, 0.0
  %v271 = vmax.f32 %v251, 0.0
  %v272 = vmax.f32 %v253, 0.0
  %v273 = vmax.f32 %v168, 0.0
  %v274 = vmax.f32 %v170, 0.0
  %v275 = vmax.f32 %v257, 0.0
  %v276 = vmax.f32 %v259, 0.0
  %277 = vst [vmem:[%s5] sm:$0xff] %v261
  %278 = vst [vmem:[%s5 + $0x8] sm:$0xff] %v262
  %279 = vst [vmem:[%s5 + $0x10] sm:$0xff] %v265
  %280 = vst [vmem:[%s5 + $0x18] sm:$0xff] %v266
  %281 = vst [vmem:[%s5 + $0x20] sm:$0xff] %v269
  %282 = vst [vmem:[%s5 + $0x28] sm:$0xff] %v270
  %283 = vst [vmem:[%s5 + $0x30] sm:$0xff] %v273
  %284 = vst [vmem:[%s5 + $0x38] sm:$0xff] %v274
  %v285 = vadd.f32 %v261, %v262
  %286 = vadd.xlane.f32.xlu0 %v285
  %v287 = vpop.xlane.xlu0 %286
  %v288 = vadd.f32 %v265, %v266
  %289 = vadd.xlane.f32.xlu0 %v288
  %v290 = vpop.xlane.xlu0 %289
  %v291 = vadd.f32 %v269, %v270
  %292 = vadd.xlane.f32.xlu0 %v291
  %v293 = vpop.xlane.xlu0 %292
  %v294 = vadd.f32 %v273, %v274
  %295 = vadd.xlane.f32.xlu0 %v294
  %v296 = vpop.xlane.xlu0 %295
  %v297 = vmul.f32 %v287, 0.00390625
  %v298 = vmul.f32 %v290, 0.00390625
  %v299 = vmul.f32 %v293, 0.00390625
  %v300 = vmul.f32 %v296, 0.00390625
  %s301 = scalar_lea.vmem %s5, 64
  %302 = vst [vmem:[%s301] sm:$0xff] %v263
  %303 = vst [vmem:[%s301 + $0x8] sm:$0xff] %v264
  %304 = vst [vmem:[%s301 + $0x10] sm:$0xff] %v267
  %305 = vst [vmem:[%s301 + $0x18] sm:$0xff] %v268
  %306 = vst [vmem:[%s301 + $0x20] sm:$0xff] %v271
  %307 = vst [vmem:[%s301 + $0x28] sm:$0xff] %v272
  %308 = vst [vmem:[%s301 + $0x30] sm:$0xff] %v275
  %309 = vst [vmem:[%s301 + $0x38] sm:$0xff] %v276
  %v310 = vadd.f32 %v263, %v264
  %311 = vadd.xlane.f32.xlu0 %v310
  %v312 = vpop.xlane.xlu0 %311
  %v313 = vadd.f32 %v267, %v268
  %314 = vadd.xlane.f32.xlu0 %v313
  %v315 = vpop.xlane.xlu0 %314
  %v316 = vadd.f32 %v271, %v272
  %317 = vadd.xlane.f32.xlu0 %v316
  %v318 = vpop.xlane.xlu0 %317
  %v319 = vadd.f32 %v275, %v276
  %320 = vadd.xlane.f32.xlu0 %v319
  %v321 = vpop.xlane.xlu0 %320
  %v322 = vmul.f32 %v312, 0.00390625
  %v323 = vmul.f32 %v315, 0.00390625
  %v324 = vmul.f32 %v318, 0.00390625
  %v325 = vmul.f32 %v321, 0.00390625
  %vm326 = vcmask 7168
  %v327 = vsel %vm326, %v297, %v322
  %v328 = vsel %vm326, %v298, %v323
  %v329 = vsel %vm326, %v299, %v324
  %v330 = vsel %vm326, %v300, %v325
  %v331 = vld [vmem:[%s3] sm:$0xff]
  %v332 = vld [vmem:[%s4] sm:$0xff]
  %334 = vset.pattern.permute.xlu0 0
  %335 = vperm.xlu0 %334, %v332
  %v336 = vpop.permute.xlu0 %335
  %vm338 = vcmask 261120
  %v340 = vsel %vm338, %v331, 0
  %342 = vmatprep.subr.mxu0 0.0
  %343 = vmatpush1.msra.mxu0 %v327
  %344 = vmatprep.subr.mxu0 0.0
  %345 = vmatpush1.msra.mxu0 %v328
  %346 = vmatprep.subr.mxu0 0.0
  %347 = vmatpush1.msra.mxu0 %v329
  %348 = vmatprep.subr.mxu0 0.0
  %349 = vmatpush1.msra.mxu0 %v330
  %350 = vmatprep.subr.mxu0 0.0
  %351 = vmatpush1.msra.mxu0 0.0
  %352 = vmatprep.subr.mxu0 0.0
  %353 = vmatpush1.msra.mxu0 0.0
  %354 = vmatprep.subr.mxu0 0.0
  %355 = vmatpush1.msra.mxu0 0.0
  %356 = vmatprep.subr.mxu0 0.0
  %357 = vmatpush1.msra.mxu0 0.0
  %358 = vmatprep.subr.mxu0 0.0
  %359 = vmatpush1.msra.mxu0 0.0
  %360 = vmatprep.subr.mxu0 0.0
  %361 = vmatpush1.msra.mxu0 0.0
  %362 = vmatprep.subr.mxu0 0.0
  %363 = vmatpush1.msra.mxu0 0.0
  %364 = vmatprep.subr.mxu0 0.0
  %365 = vmatpush1.msra.mxu0 0.0
  %366 = vmatprep.subr.mxu0 0.0
  %367 = vmatpush1.msra.mxu0 0.0
  %368 = vmatprep.subr.mxu0 0.0
  %369 = vmatpush1.msra.mxu0 0.0
  %370 = vmatprep.subr.mxu0 0.0
  %371 = vmatpush1.msra.mxu0 0.0
  %372 = vmatprep.subr.mxu0 0.0
  %373 = vmatpush1.msra.mxu0 0.0
  %374 = vmatprep.subr.mxu0 0.0
  %375 = vmatpush1.msra.mxu0 0.0
  %376 = vmatprep.subr.mxu0 0.0
  %377 = vmatpush1.msra.mxu0 0.0
  %378 = vmatprep.subr.mxu0 0.0
  %379 = vmatpush1.msra.mxu0 0.0
  %380 = vmatprep.subr.mxu0 0.0
  %381 = vmatpush1.msra.mxu0 0.0
  %382 = vmatprep.subr.mxu0 0.0
  %383 = vmatpush1.msra.mxu0 0.0
  %384 = vmatprep.subr.mxu0 0.0
  %385 = vmatpush1.msra.mxu0 0.0
  %386 = vmatprep.subr.mxu0 0.0
  %387 = vmatpush1.msra.mxu0 0.0
  %388 = vmatprep.subr.mxu0 0.0
  %389 = vmatpush1.msra.mxu0 0.0
  %390 = vmatprep.subr.mxu0 0.0
  %391 = vmatpush1.msra.mxu0 0.0
  %392 = vmatprep.subr.mxu0 0.0
  %393 = vmatpush1.msra.mxu0 0.0
  %394 = vmatprep.subr.mxu0 0.0
  %395 = vmatpush1.msra.mxu0 0.0
  %396 = vmatprep.subr.mxu0 0.0
  %397 = vmatpush1.msra.mxu0 0.0
  %398 = vmatprep.subr.mxu0 0.0
  %399 = vmatpush1.msra.mxu0 0.0
  %400 = vmatprep.subr.mxu0 0.0
  %401 = vmatpush1.msra.mxu0 0.0
  %402 = vmatprep.subr.mxu0 0.0
  %403 = vmatpush1.msra.mxu0 0.0
  %404 = vmatprep.subr.mxu0 0.0
  %405 = vmatpush1.msra.mxu0 0.0
  %406 = vmatprep.mubr.f32.mxu0 0.0
  %407 = vmatmul.mubr.f32.gmra.mrb[0].mxu0 %v340
  %v408 = vpop.f32.mrb[0].mxu0
  %v409 = vadd.f32 %v336, %v408
  %v410 = vpop.f32.mrb[0].mxu0
  %411 = vdwg.mxu0
  %vm412 = vcmask 15360
  %413 = vst.msk [vmem:[%s6] sm:$0xff] %vm412, %v409
  // Predicated region
  $region22: #{hook_model_forward.1} parent=0 // pred_check
    _
  $region23: #{hook_model_forward.1} parent=0 // pred_check_branch
    %415 = sbr.rel (0) target = $region25
  $region24: #{hook_model_forward.1} parent=0 // pred_region
    _
  $region25: #{hook_model_forward.1} parent=0 // pred_fallthru
    _
  // Predicated region
  $region26: #{hook_model_forward.1} parent=0 // pred_check
    _
  $region27: #{hook_model_forward.1} parent=0 // pred_check_branch
    %417 = sbr.rel (0) target = $region29
  $region28: #{hook_model_forward.1} parent=0 // pred_region
    _
  $region29: #{hook_model_forward.1} parent=0 // pred_fallthru
    _
  // Predicated region
  $region30: #{hook_model_forward.1} parent=0 // pred_check
    _
  $region31: #{hook_model_forward.1} parent=0 // pred_check_branch
    %419 = sbr.rel (0) target = $region33
  $region32: #{hook_model_forward.1} parent=0 // pred_region
    _
  $region33: #{hook_model_forward.1} parent=0 // pred_fallthru
    _
  // Predicated region
  $region34: #{hook_model_forward.1} parent=0 // pred_check
    _
  $region35: #{hook_model_forward.1} parent=0 // pred_check_branch
    %421 = sbr.rel (0) target = $region37
  $region36: #{hook_model_forward.1} parent=0 // pred_region
    _
  $region37: #{hook_model_forward.1} parent=0 // pred_fallthru
    _

</llo_original>
